<compile_context>
chip_gen: v6e
topology: v6e:2x2x1
jax: 0.10.0
libtpu: 0.0.40
codegen_flags: <defaults>
</compile_context>

<pallas_src>
import jax
import jax.numpy as jnp
from jax.experimental import pallas as pl
from jax.experimental.pallas import tpu as pltpu

_MAX_TILE_B = 2048  # 2048*512*4B = 4 MiB per x tile, 8 MiB double-buffered.


def _round_up(n, m):
    return ((n + m - 1) // m) * m


def _cls_head_reduce_kernel(x_ref, w_ref, b_ref, out_ref):
    # num_classes == 1 path: VPU multiply + lane reduce (no MXU).
    # x_ref:   (TILE_B, fc_node)  VMEM   (streamed per grid step)
    # w_ref:   (1, fc_node)       VMEM   (resident across grid)
    # b_ref:   (1,)               SMEM   (scalar bias)
    # out_ref: (TILE_B, 1)        VMEM
    prod = x_ref[...].astype(jnp.float32) * w_ref[...].astype(jnp.float32)
    out_ref[...] = (
        jnp.sum(prod, axis=-1, keepdims=True) + b_ref[0]
    ).astype(out_ref.dtype)


def _cls_head_matmul_kernel(x_ref, w_ref, b_ref, out_ref):
    # num_classes > 1 path: MXU dot.
    # x_ref:   (TILE_B, fc_node)  VMEM
    # w_ref:   (fc_node, C)       VMEM   (resident, transposed PyTorch weight)
    # b_ref:   (1, C)             VMEM   (resident)
    # out_ref: (TILE_B, C)        VMEM
    out_ref[...] = (
        jnp.dot(x_ref[...], w_ref[...], preferred_element_type=jnp.float32)
        + b_ref[...]
    ).astype(out_ref.dtype)


def classifier_forward(x, weight, bias, num_classes=1):
    """JAX wrapper reproducing Classifier.forward (default config).

    x:      (B, fc_node) float32
    weight: (num_classes, fc_node) float32   (PyTorch Linear layout)
    bias:   (num_classes,) float32
    Returns (code, out) == (x, squeezed logits).
    """
    B, fc_node = x.shape
    C = weight.shape[0]

    # Batch tiling (multiple of 8, capped for portable VMEM budget).
    tile_b = min(_MAX_TILE_B, _round_up(B, 8))
    b_pad = _round_up(B, tile_b)
    x_in = x if b_pad == B else jnp.pad(x, ((0, b_pad - B), (0, 0)))

    grid = (b_pad // tile_b,)
    cparams = pltpu.CompilerParams(dimension_semantics=("parallel",))
    cost = pl.CostEstimate(
        flops=2 * b_pad * fc_node * C,
        transcendentals=0,
        bytes_accessed=b_pad * fc_node * 4 + fc_node * C * 4 + b_pad * C * 4,
    )

    if C == 1:
        out = pl.pallas_call(
            _cls_head_reduce_kernel,
            out_shape=jax.ShapeDtypeStruct((b_pad, 1), jnp.float32),
            grid=grid,
            in_specs=[
                pl.BlockSpec((tile_b, fc_node), lambda i: (i, 0)),
                pl.BlockSpec((1, fc_node), lambda i: (0, 0)),       # resident
                pl.BlockSpec(memory_space=pltpu.MemorySpace.SMEM),  # scalar b
            ],
            out_specs=pl.BlockSpec((tile_b, 1), lambda i: (i, 0)),
            compiler_params=cparams,
            cost_estimate=cost,
        )(x_in, weight, bias)  # weight already (1, fc_node)
    else:
        out = pl.pallas_call(
            _cls_head_matmul_kernel,
            out_shape=jax.ShapeDtypeStruct((b_pad, C), jnp.float32),
            grid=grid,
            in_specs=[
                pl.BlockSpec((tile_b, fc_node), lambda i: (i, 0)),
                pl.BlockSpec((fc_node, C), lambda i: (0, 0)),  # resident
                pl.BlockSpec((1, C), lambda i: (0, 0)),        # resident
            ],
            out_specs=pl.BlockSpec((tile_b, C), lambda i: (i, 0)),
            compiler_params=cparams,
            cost_estimate=cost,
        )(x_in, weight.T, bias.reshape(1, C))

    out = out[:B]
    if num_classes == 1:
        # Matches torch .squeeze(): B == 1 collapses to a 0-d scalar.
        out = jnp.squeeze(out)
    return x, out


def init_classifier_params(key, fc_node=512, num_classes=1):
    """Deterministic init matching nn.Linear shapes (synthetic weights)."""
    kw, kb = jax.random.split(key)
    bound = 1.0 / jnp.sqrt(fc_node)
    weight = jax.random.uniform(
        kw, (num_classes, fc_node), jnp.float32, -bound, bound
    )
    bias = jax.random.uniform(kb, (num_classes,), jnp.float32, -bound, bound)
    return weight, bias


if __name__ == "__main__":
    key = jax.random.PRNGKey(0)
    k_x, k_p, k_x2, k_p2 = jax.random.split(key, 4)

    B, fc_node, num_classes = 8, 512, 1
    x = jax.random.normal(k_x, (B, fc_node), jnp.float32)
    weight, bias = init_classifier_params(k_p, fc_node, num_classes)

    # Default-config path (num_classes == 1, VPU reduce kernel).
    code, out = classifier_forward(x, weight, bias, num_classes=num_classes)
    jax.block_until_ready((code, out))
    ref = jnp.squeeze(x @ weight.T + bias)
    assert out.shape == (B,)
    assert jnp.allclose(out, ref, atol=1e-4, rtol=1e-4)
    assert jnp.array_equal(code, x)

    # Ragged batch — exercises the padding / tiling path.
    B2 = 13
    x2 = jax.random.normal(k_x2, (B2, fc_node), jnp.float32)
    _, out2 = classifier_forward(x2, weight, bias, num_classes=num_classes)
    jax.block_until_ready(out2)
    ref2 = jnp.squeeze(x2 @ weight.T + bias)
    assert out2.shape == (B2,)
    assert jnp.allclose(out2, ref2, atol=1e-4, rtol=1e-4)

    # Multi-class head path (MXU kernel; same Linear math as voc_head would use).
    C3 = 8
    w3, b3 = init_classifier_params(k_p2, fc_node, C3)
    _, out3 = classifier_forward(x, w3, b3, num_classes=C3)
    jax.block_until_ready(out3)
    ref3 = x @ w3.T + b3
    assert out3.shape == (B, C3)
    assert jnp.allclose(out3, ref3, atol=1e-4, rtol=1e-4)

    print("KERNEL_OK")
</pallas_src>

<mosaic_0001>
module attributes {stable_mosaic.version = 11 : i64} {
  func.func @_cls_head_reduce_kernel(%arg0: i32, %arg1: memref<8x512xf32, #tpu.memory_space<vmem>>, %arg2: memref<1x512xf32, #tpu.memory_space<vmem>>, %arg3: memref<1xf32, #tpu.memory_space<smem>>, %arg4: memref<8x1xf32, #tpu.memory_space<vmem>>) attributes {dimension_semantics = [#tpu.dimension_semantics<parallel>], iteration_bounds = array<i64: 1>, scalar_prefetch = 0 : i64, scratch_operands = 0 : i64, tpu.core_type = #tpu.core_type<tc>, window_params = [{transform_indices = @transform_0, window_bounds = array<i64: 8, 512>}, {pipeline_mode = #tpu.pipeline_mode<synchronous>, transform_indices = @transform_1, window_bounds = array<i64: 1, 512>}, {transform_indices = @transform_2, window_bounds = array<i64: 1>}, {transform_indices = @transform_3, window_bounds = array<i64: 8, 1>}]} {
    %c0 = arith.constant 0 : index
    %c0_0 = arith.constant 0 : index
    %0 = vector.load %arg1[%c0, %c0_0] : memref<8x512xf32, #tpu.memory_space<vmem>>, vector<8x512xf32>
    %c0_1 = arith.constant 0 : index
    %c0_2 = arith.constant 0 : index
    %1 = vector.load %arg2[%c0_1, %c0_2] : memref<1x512xf32, #tpu.memory_space<vmem>>, vector<1x512xf32>
    %2 = vector.broadcast %1 : vector<1x512xf32> to vector<8x512xf32>
    %3 = arith.mulf %0, %2 : vector<8x512xf32>
    %cst = arith.constant dense<0.000000e+00> : vector<8xf32>
    %4 = vector.multi_reduction <add>, %3, %cst [1] : vector<8x512xf32> to vector<8xf32>
    %5 = vector.shape_cast %4 : vector<8xf32> to vector<8x1xf32>
    %c0_3 = arith.constant 0 : index
    %6 = memref.load %arg3[%c0_3] : memref<1xf32, #tpu.memory_space<smem>>
    %7 = vector.broadcast %6 : f32 to vector<8x1xf32>
    %8 = arith.addf %5, %7 : vector<8x1xf32>
    %c0_4 = arith.constant 0 : index
    %c0_5 = arith.constant 0 : index
    %9 = vector.load %arg4[%c0_4, %c0_5] : memref<8x1xf32, #tpu.memory_space<vmem>>, vector<8x1xf32>
    tpu.vector_store %arg4[%c0_4, %c0_5], %8 {strides = array<i32>} : memref<8x1xf32, #tpu.memory_space<vmem>>, vector<8x1xf32>,
    return
  }
  func.func @transform_0(%arg0: i32) -> (i32, i32) {
    %c0_i32 = arith.constant 0 : i32
    %c0_i32_0 = arith.constant 0 : i32
    return %arg0, %c0_i32 : i32, i32
  }
  func.func @transform_1(%arg0: i32) -> (i32, i32) {
    %c0_i32 = arith.constant 0 : i32
    %c0_i32_0 = arith.constant 0 : i32
    %c0_i32_1 = arith.constant 0 : i32
    return %c0_i32, %c0_i32_0 : i32, i32
  }
  func.func @transform_2(%arg0: i32) -> i32 {
    %c0_i32 = arith.constant 0 : i32
    %c0_i32_0 = arith.constant 0 : i32
    return %c0_i32 : i32
  }
  func.func @transform_3(%arg0: i32) -> (i32, i32) {
    %c0_i32 = arith.constant 0 : i32
    %c0_i32_0 = arith.constant 0 : i32
    return %arg0, %c0_i32 : i32, i32
  }
}

</mosaic_0001>

<llo_original>
// kernel: tpu_custom_call.1
$region0: #{tpu_custom_call.1}
  #allocation0 [shape = 'u32[]', space=smem, size = 0x4, offset = 0x4, fixed_abs, tag = 'smem constant byte address 0x4 - core index']
  #allocation1 [shape = 'u32[144,128]{1,0:T(1,128)}', space=vmem, size = 0x12000, scoped, tag = 'internal scratch']
  #allocation2 [shape = 'f32[1]{0:T(128)S(6)}', space=smem, size = 0x200, scoped, tag = 'scoped memory for tpu_custom_call.1']
  %s0 = inlined_call_operand.hbm [shape: f32[8,512], index: 0, kind: input, shape index: {}]
  %s1 = inlined_call_operand.hbm [shape: f32[1,512], index: 1, kind: input, shape index: {}]
  %s2 = inlined_call_operand.<no memory space> [shape: f32[1], index: 2, kind: input, shape index: {}]
  %s3 = inlined_call_operand.vmem [shape: f32[8,1], index: 3, kind: output, shape index: {}]
  %s4 = sld [smem:[#allocation0]]
  $region30: #{tpu_custom_call.1} parent=0
    _
  %s6 = ssub.s32 1, %s4
  %s7 = scalar_select 0, %s6, %s4
  %8 = sst [smem:[#allocation2]] %s2
  $region1: #{tpu_custom_call.1} parent=0
    #allocation3 [shape = 'u8[16384]{0}', space=vmem, size = 0x4000, scoped, tag = 'input window, operand 0, single buffered']
    #allocation4 [shape = 's32[1]{0}', space=sflag, size = 0x4, scoped, tag = 'scoped memory for tpu_custom_call.1']
    #allocation5 [shape = 'u8[2048]{0}', space=vmem, size = 0x800, scoped, tag = 'input window, operand 1, single buffered']
    #allocation6 [shape = 's32[1]{0}', space=sflag, size = 0x4, scoped, tag = 'scoped memory for tpu_custom_call.1']
    %9 = vsyncpa [#allocation4], 0
    %10 = vsyncpa [#allocation6], 0
    // Predicated region
    $region2: #{tpu_custom_call.1} parent=1 // pred_check
      _
    $region3: #{tpu_custom_call.1} parent=1 // pred_check_branch
      %12 = sbr.rel (0) target = $region5
    $region4: #{tpu_custom_call.1} parent=1 // pred_region
      %s14 = ssub.s32 512, 512
      %15 = vsyncadd [#allocation4], %s14
      %s17 = sshll.u32 [#allocation3], 4
      %s18 = int_to_ptr.vmem [resolvable:$true] %s17
      %20 = dma.hbm_to_vmem [thread:$0]  %s0, 512, %s18, [#allocation4]
    $region5: #{tpu_custom_call.1} parent=1 // pred_fallthru
      _
    // Predicated region
    $region6: #{tpu_custom_call.1} parent=1 // pred_check
      _
    $region7: #{tpu_custom_call.1} parent=1 // pred_check_branch
      %22 = sbr.rel (0) target = $region9
    $region8: #{tpu_custom_call.1} parent=1 // pred_region
      %s24 = ssub.s32 64, 64
      %25 = vsyncadd [#allocation6], %s24
      %s27 = sshll.u32 [#allocation5], 4
      %s28 = int_to_ptr.vmem [resolvable:$true] %s27
      %30 = dma.hbm_to_vmem [thread:$0]  %s1, 64, %s28, [#allocation6]
    $region9: #{tpu_custom_call.1} parent=1 // pred_fallthru
      _
    // Predicated region
    $region10: #{tpu_custom_call.1} parent=1 // pred_check
      _
    $region11: #{tpu_custom_call.1} parent=1 // pred_check_branch
      %32 = sbr.rel (0) target = $region13
    $region12: #{tpu_custom_call.1} parent=1 // pred_region
      _
    $region13: #{tpu_custom_call.1} parent=1 // pred_fallthru
      _
    // Predicated region
    $region14: #{tpu_custom_call.1} parent=1 // pred_check
      _
    $region15: #{tpu_custom_call.1} parent=1 // pred_check_branch
      %34 = sbr.rel (0) target = $region17
    $region16: #{tpu_custom_call.1} parent=1 // pred_region
      %35 = dma.done [#allocation4], 512
    $region17: #{tpu_custom_call.1} parent=1 // pred_fallthru
      _
    // Predicated region
    $region18: #{tpu_custom_call.1} parent=1 // pred_check
      _
    $region19: #{tpu_custom_call.1} parent=1 // pred_check_branch
      %37 = sbr.rel (0) target = $region21
    $region20: #{tpu_custom_call.1} parent=1 // pred_region
      %38 = dma.done [#allocation6], 64
    $region21: #{tpu_custom_call.1} parent=1 // pred_fallthru
      _
    %v39 = vld [vmem:[#allocation3] sm:$0xff]
    %v40 = vld [vmem:[#allocation3 + $0x8] sm:$0xff]
    %v41 = vld [vmem:[#allocation3 + $0x10] sm:$0xff]
    %v42 = vld [vmem:[#allocation3 + $0x18] sm:$0xff]
    %v43 = vld [vmem:[#allocation5] sm:$0xf]
    %v45 = vlaneseq
    %v46 = vshrl.u32 %v45, 7
    %v47 = vsub.s32 0, %v46
    %v48 = vrot.slane %v43, %v47
    %v49 = vlaneseq
    %v50 = vshrl.u32 %v49, 7
    %v51 = vsub.s32 1, %v50
    %v52 = vrot.slane %v43, %v51
    %v53 = vlaneseq
    %v54 = vshrl.u32 %v53, 7
    %v55 = vsub.s32 2, %v54
    %v56 = vrot.slane %v43, %v55
    %v57 = vlaneseq
    %v58 = vshrl.u32 %v57, 7
    %v59 = vsub.s32 3, %v58
    %v60 = vrot.slane %v43, %v59
    %v65 = vmul.f32 %v39, %v48
    %v66 = vmul.f32 %v40, %v52
    %v67 = vmul.f32 %v41, %v56
    %v68 = vmul.f32 %v42, %v60
    %v69 = vadd.f32 %v65, %v66
    %v70 = vadd.f32 %v69, %v67
    %v71 = vadd.f32 %v70, %v68
    %72 = vadd.xlane.f32.xlu0 %v71
    %v73 = vpop.xlane.xlu0 %72
    %s74 = sld [smem:[#allocation2]]
    %v75 = vstv %s74
    %v76 = vadd.f32 %v73, %v75
    %vm77 = vcmask 7168
    %78 = vst.msk [vmem:[%s3] sm:$0xff] %vm77, %v76
    // Predicated region
    $region22: #{tpu_custom_call.1} parent=1 // pred_check
      _
    $region23: #{tpu_custom_call.1} parent=1 // pred_check_branch
      %80 = sbr.rel (0) target = $region25
    $region24: #{tpu_custom_call.1} parent=1 // pred_region
      _
    $region25: #{tpu_custom_call.1} parent=1 // pred_fallthru
      _
    // Predicated region
    $region26: #{tpu_custom_call.1} parent=1 // pred_check
      _
    $region27: #{tpu_custom_call.1} parent=1 // pred_check_branch
      %82 = sbr.rel (0) target = $region29
    $region28: #{tpu_custom_call.1} parent=1 // pred_region
      _
    $region29: #{tpu_custom_call.1} parent=1 // pred_fallthru
      _
    %83 = vsyncpa [#allocation4], 1
    %84 = vsyncpa [#allocation6], 1

</llo_original>
